<compile_context>
chip_gen: v7x
topology: tpu7x:2x2x1
jax: 0.10.0
libtpu: 0.0.40
codegen_flags: <defaults>
</compile_context>

<pallas_src>
import functools

import jax
import jax.numpy as jnp
from jax.experimental import pallas as pl
from jax.experimental.pallas import tpu as pltpu


_MU = 1.0 / 3.0
_PAD = 30000.0                 # log1p(exp(-|pad|)) == 0 exactly in f32
_TARGET_BLOCK_BYTES = 4 << 20  # ~4 MiB score block: near HBM roofline on v5e/v6e/v7x
_LARGE_WEIGHT_BYTES = 8 << 20  # above this, regularizer is computed with plain XLA


def _cdiv(a, b):
    return -(-a // b)


def _acid_loss_kernel(score_ref, w_ref, out_ref, acc_ref, cls_ref, lane_ref, *,
                      n_rows, n_cls, certify_class, lambda_, mu,
                      col_tile, needs_mask):
    c = pl.program_id(0)                      # shard (TensorCore) index
    i = pl.program_id(1)                      # tile index within the shard
    tiles_per_shard = pl.num_programs(1)

    @pl.when(i == 0)
    def _init():
        acc_ref[...] = jnp.zeros_like(acc_ref)
        cls_ref[...] = jax.lax.broadcasted_iota(
            jnp.int32, cls_ref.shape, 0).astype(jnp.float32)
        lane_ref[...] = jax.lax.broadcasted_iota(jnp.int32, lane_ref.shape, 1)

    s = score_ref[...].astype(jnp.float32)                # (C, T): batch on lanes
    cls_idx = cls_ref[...]                                # (C, T): class id per sublane
    cc = jnp.float32(certify_class)

    # torch argmax(score, dim=1) with first-max tie-break, along the class axis.
    col_max = jnp.max(s, axis=0, keepdims=True)           # (1, T)
    cand = jnp.where(s == col_max, cls_idx, jnp.float32(n_cls))
    first_max = jnp.min(cand, axis=0, keepdims=True)      # (1, T)
    is_correct = first_max == cc                          # (1, T)

    # target: correct sample -> ones except cc; wrong sample -> zeros except cc.
    is_cc = cls_idx == cc                                 # (C, T)
    tgt = jnp.logical_xor(is_correct, is_cc)              # (C, T)

    # MultiLabelSoftMargin element: softplus((1 - 2*t) * s), numerically stable.
    x = jnp.where(tgt, -s, s)
    sp = jnp.maximum(x, 0.0) + jnp.log1p(jnp.exp(-jnp.abs(x)))
    col_sum = jnp.sum(sp, axis=0, keepdims=True)          # (1, T) per-sample sums

    if needs_mask:
        g = c * tiles_per_shard + i                       # global tile index
        rem = n_rows - g * col_tile                       # valid lanes in this tile
        col_sum = jnp.where(lane_ref[...] < rem, col_sum, 0.0)

    acc_ref[...] += col_sum                               # pure VPU add per step

    @pl.when(i == tiles_per_shard - 1)
    def _finalize():
        part = jnp.sum(acc_ref[...]) * (mu / (n_rows * n_cls))
        w = w_ref[...].astype(jnp.float32)
        reg = jnp.sum(jnp.log1p(jnp.exp(-jnp.abs(w))))    # pad lanes contribute 0
        part = part + jnp.where(c == 0, lambda_ * reg, jnp.float32(0.0))
        out_ref[...] = jnp.full(out_ref.shape, part, jnp.float32)


def acid_loss(score, weight, *, certify_class, lambda_, mu=_MU, col_tile=None):
    """score: (N, C) float; weight: any shape (regularizer term)."""
    N, C = score.shape
    cc = int(certify_class)
    assert 0 <= cc < C

    # Lane-dense layout: small class axis on sublanes, big batch axis on lanes.
    # TODO(synk): very large C (multi-MB class-major tiles) would need class tiling.
    score_t = jnp.transpose(score)                        # (C, N)
    esize = score.dtype.itemsize

    if col_tile is None:
        t = _TARGET_BLOCK_BYTES // max(1, C * esize)
        col_tile = max(128, (t // 128) * 128)
    else:
        col_tile = max(128, (int(col_tile) // 128) * 128)
    if col_tile >= N:
        col_tile = N                                      # single full-extent tile
    n_tiles = _cdiv(N, col_tile)

    n_shards = 2 if n_tiles >= 4 else 1                   # both TensorCores on v7x
    tiles_per_shard = _cdiv(n_tiles, n_shards)
    needs_mask = (N % col_tile != 0) or (n_shards * tiles_per_shard != n_tiles)

    # Weight as a lane-dense (rows, 128) slab in its original dtype, padded with a
    # value whose softplus contribution is exactly zero.
    w_flat = jnp.reshape(weight, (-1,))
    W = w_flat.shape[0]
    reg_outside = None
    if W * w_flat.dtype.itemsize > _LARGE_WEIGHT_BYTES:
        # MB-scale weights: keep the kernel VMEM budget for the score pipeline.
        reg_outside = jnp.sum(jnp.log1p(jnp.exp(-jnp.abs(w_flat.astype(jnp.float32)))))
        w2d = jnp.full((1, 128), _PAD, dtype=jnp.float32)
    else:
        Wp = _cdiv(W, 128) * 128
        w2d = jnp.reshape(jnp.pad(w_flat, (0, Wp - W), constant_values=_PAD),
                          (Wp // 128, 128))
    Wr = w2d.shape[0]

    kernel = functools.partial(
        _acid_loss_kernel,
        n_rows=N, n_cls=C, certify_class=cc,
        lambda_=float(lambda_), mu=float(mu),
        col_tile=col_tile, needs_mask=needs_mask)

    block_in = C * col_tile * esize
    vmem_est = (2 * block_in                      # double-buffered score tile
                + C * col_tile * 4                # class-index scratch
                + 2 * col_tile * 4                # accumulator + lane-index scratch
                + 2 * Wr * 128 * w2d.dtype.itemsize
                + 2 * n_shards * 8 * 128 * 4)     # output slabs
    vmem_limit = int(min(max(2 * vmem_est + (4 << 20), 32 << 20), 56 << 20))

    out = pl.pallas_call(
        kernel,
        out_shape=jax.ShapeDtypeStruct((n_shards, 8, 128), jnp.float32),
        grid=(n_shards, tiles_per_shard),
        in_specs=[
            # score tile: clamp the logical tile index (over-run tiles are masked)
            pl.BlockSpec((C, col_tile),
                         lambda c, i: (0, jnp.minimum(c * tiles_per_shard + i,
                                                      n_tiles - 1))),
            # weight slab: resident (constant index)
            pl.BlockSpec((Wr, 128), lambda c, i: (0, 0)),
        ],
        out_specs=pl.BlockSpec((1, 8, 128), lambda c, i: (c, 0, 0)),
        scratch_shapes=[
            pltpu.VMEM((1, col_tile), jnp.float32),   # per-lane running sum
            pltpu.VMEM((C, col_tile), jnp.float32),   # class-index slab (built once)
            pltpu.VMEM((1, col_tile), jnp.int32),     # lane index (built once)
        ],
        compiler_params=pltpu.CompilerParams(
            dimension_semantics=("parallel", "arbitrary"),
            vmem_limit_bytes=vmem_limit),
    )(score_t, w2d)

    loss = jnp.sum(out[:, 0, 0])
    if reg_outside is not None:
        loss = loss + jnp.float32(lambda_) * reg_outside
    return loss


def reference_loss(score, weight, certify_class, lambda_, mu=_MU):
    N, C = score.shape
    pred = jnp.argmax(score, axis=1)
    correct = (pred == certify_class)[:, None]
    is_cc = jnp.arange(C)[None, :] == certify_class
    target = jnp.logical_xor(correct, is_cc).astype(jnp.float32)
    s = score.astype(jnp.float32)
    logsig = jax.nn.log_sigmoid
    per_row = -(1.0 / C) * jnp.sum(
        target * logsig(s) + (1.0 - target) * logsig(-s), axis=1)
    loss = jnp.sum(per_row) / N
    reg = jnp.sum(jnp.log1p(jnp.exp(-jnp.abs(weight.astype(jnp.float32)))))
    return mu * loss + lambda_ * reg


if __name__ == "__main__":
    key = jax.random.PRNGKey(0)
    k_s, k_w, k_s2 = jax.random.split(key, 3)

    # Shapes consistent with the module: batch N=8, C=10 classes, certified
    # class 3, regularizer weight row of 32 parameters.
    N, C = 8, 10
    certify_class = 3
    lambda_ = 0.05

    score = jax.random.normal(k_s, (N, C), dtype=jnp.float32)
    weight = 0.01 * jax.random.normal(k_w, (1, 32), dtype=jnp.float32)

    out = acid_loss(score, weight, certify_class=certify_class, lambda_=lambda_)
    out = jax.block_until_ready(out)
    ref = reference_loss(score, weight, certify_class, lambda_)
    assert out.shape == () and out.dtype == jnp.float32
    assert jnp.allclose(out, ref, atol=1e-5, rtol=1e-5), (float(out), float(ref))

    # Second check: multi-tile grid, dual-shard split, partial last tile masking.
    N2 = 1000
    score2 = jax.random.normal(k_s2, (N2, C), dtype=jnp.float32)
    out2 = jax.block_until_ready(
        acid_loss(score2, weight, certify_class=certify_class, lambda_=lambda_,
                  col_tile=128))
    ref2 = reference_loss(score2, weight, certify_class, lambda_)
    assert jnp.allclose(out2, ref2, atol=1e-5, rtol=1e-5), (float(out2), float(ref2))

    print("KERNEL_OK")
</pallas_src>

<mosaic_0001>
module attributes {stable_mosaic.version = 11 : i64} {
  func.func @_acid_loss_kernel(%arg0: i32, %arg1: i32, %arg2: memref<10x8xf32, #tpu.memory_space<vmem>>, %arg3: memref<1x128xf32, #tpu.memory_space<vmem>>, %arg4: memref<1x8x128xf32, #tpu.memory_space<vmem>>, %arg5: memref<1x8xf32, #tpu.memory_space<vmem>>, %arg6: memref<10x8xf32, #tpu.memory_space<vmem>>, %arg7: memref<1x8xi32, #tpu.memory_space<vmem>>) attributes {dimension_semantics = [#tpu.dimension_semantics<parallel>, #tpu.dimension_semantics<arbitrary>], iteration_bounds = array<i64: 1, 1>, scalar_prefetch = 0 : i64, scratch_operands = 3 : i64, tpu.core_type = #tpu.core_type<tc>, window_params = [{transform_indices = @transform_0, window_bounds = array<i64: 10, 8>}, {pipeline_mode = #tpu.pipeline_mode<synchronous>, transform_indices = @transform_1, window_bounds = array<i64: 1, 128>}, {transform_indices = @transform_2, window_bounds = array<i64: 1, 8, 128>}]} {
    %c0_i32 = arith.constant 0 : i32
    %0 = arith.cmpi eq, %arg1, %c0_i32 : i32
    %1 = arith.extui %0 : i1 to i32
    %c0_i32_0 = arith.constant 0 : i32
    %2 = arith.cmpi ne, %1, %c0_i32_0 : i32
    scf.if %2 {
      %cst_18 = arith.constant 0.000000e+00 : f32
      %38 = vector.broadcast %cst_18 : f32 to vector<1x8xf32>
      %c0_19 = arith.constant 0 : index
      %c0_20 = arith.constant 0 : index
      %39 = vector.load %arg5[%c0_19, %c0_20] : memref<1x8xf32, #tpu.memory_space<vmem>>, vector<1x8xf32>
      tpu.vector_store %arg5[%c0_19, %c0_20], %38 {strides = array<i32>} : memref<1x8xf32, #tpu.memory_space<vmem>>, vector<1x8xf32>,
      %40 = tpu.iota {dimensions = array<i32: 0>} : vector<10x8xi32>
      %41 = arith.sitofp %40 : vector<10x8xi32> to vector<10x8xf32>
      %c0_21 = arith.constant 0 : index
      %c0_22 = arith.constant 0 : index
      %42 = vector.load %arg6[%c0_21, %c0_22] : memref<10x8xf32, #tpu.memory_space<vmem>>, vector<10x8xf32>
      tpu.vector_store %arg6[%c0_21, %c0_22], %41 {strides = array<i32>} : memref<10x8xf32, #tpu.memory_space<vmem>>, vector<10x8xf32>,
      %43 = tpu.iota {dimensions = array<i32: 1>} : vector<1x8xi32>
      %c0_23 = arith.constant 0 : index
      %c0_24 = arith.constant 0 : index
      %44 = vector.load %arg7[%c0_23, %c0_24] : memref<1x8xi32, #tpu.memory_space<vmem>>, vector<1x8xi32>
      tpu.vector_store %arg7[%c0_23, %c0_24], %43 {strides = array<i32>} : memref<1x8xi32, #tpu.memory_space<vmem>>, vector<1x8xi32>,
    } else {
    }
    %c0 = arith.constant 0 : index
    %c0_1 = arith.constant 0 : index
    %3 = vector.load %arg2[%c0, %c0_1] : memref<10x8xf32, #tpu.memory_space<vmem>>, vector<10x8xf32>
    %c0_2 = arith.constant 0 : index
    %c0_3 = arith.constant 0 : index
    %4 = vector.load %arg6[%c0_2, %c0_3] : memref<10x8xf32, #tpu.memory_space<vmem>>, vector<10x8xf32>
    %cst = arith.constant dense<0xFF800000> : vector<8xf32>
    %5 = vector.multi_reduction <maximumf>, %3, %cst [0] : vector<10x8xf32> to vector<8xf32>
    %6 = vector.shape_cast %5 : vector<8xf32> to vector<1x8xf32>
    %7 = vector.broadcast %6 : vector<1x8xf32> to vector<10x8xf32>
    %8 = arith.cmpf oeq, %3, %7 : vector<10x8xf32>
    %cst_4 = arith.constant 1.000000e+01 : f32
    %9 = vector.broadcast %cst_4 : f32 to vector<10x8xf32>
    %10 = arith.select %8, %4, %9 : vector<10x8xi1>, vector<10x8xf32>
    %cst_5 = arith.constant dense<0x7F800000> : vector<8xf32>
    %11 = vector.multi_reduction <minimumf>, %10, %cst_5 [0] : vector<10x8xf32> to vector<8xf32>
    %12 = vector.shape_cast %11 : vector<8xf32> to vector<1x8xf32>
    %cst_6 = arith.constant 3.000000e+00 : f32
    %13 = vector.broadcast %cst_6 : f32 to vector<1x8xf32>
    %14 = arith.cmpf oeq, %12, %13 : vector<1x8xf32>
    %cst_7 = arith.constant 3.000000e+00 : f32
    %15 = vector.broadcast %cst_7 : f32 to vector<10x8xf32>
    %16 = arith.cmpf oeq, %4, %15 : vector<10x8xf32>
    %17 = vector.broadcast %14 : vector<1x8xi1> to vector<10x8xi1>
    %18 = arith.xori %17, %16 : vector<10x8xi1>
    %cst_8 = arith.constant 0.000000e+00 : f32
    %19 = vector.broadcast %cst_8 : f32 to vector<10x8xf32>
    %20 = arith.subf %19, %3 : vector<10x8xf32>
    %21 = arith.select %18, %20, %3 : vector<10x8xi1>, vector<10x8xf32>
    %cst_9 = arith.constant 0.000000e+00 : f32
    %22 = vector.broadcast %cst_9 : f32 to vector<10x8xf32>
    %23 = arith.maximumf %21, %22 : vector<10x8xf32>
    %24 = math.absf %21 : vector<10x8xf32>
    %cst_10 = arith.constant 0.000000e+00 : f32
    %25 = vector.broadcast %cst_10 : f32 to vector<10x8xf32>
    %26 = arith.subf %25, %24 : vector<10x8xf32>
    %27 = math.exp %26 : vector<10x8xf32>
    %28 = math.log1p %27 : vector<10x8xf32>
    %29 = arith.addf %23, %28 : vector<10x8xf32>
    %cst_11 = arith.constant dense<0.000000e+00> : vector<8xf32>
    %30 = vector.multi_reduction <add>, %29, %cst_11 [0] : vector<10x8xf32> to vector<8xf32>
    %31 = vector.shape_cast %30 : vector<8xf32> to vector<1x8xf32>
    %c0_12 = arith.constant 0 : index
    %c0_13 = arith.constant 0 : index
    %32 = vector.load %arg5[%c0_12, %c0_13] : memref<1x8xf32, #tpu.memory_space<vmem>>, vector<1x8xf32>
    %33 = arith.addf %32, %31 : vector<1x8xf32>
    %c0_14 = arith.constant 0 : index
    %c0_15 = arith.constant 0 : index
    %34 = vector.load %arg5[%c0_14, %c0_15] : memref<1x8xf32, #tpu.memory_space<vmem>>, vector<1x8xf32>
    tpu.vector_store %arg5[%c0_14, %c0_15], %33 {strides = array<i32>} : memref<1x8xf32, #tpu.memory_space<vmem>>, vector<1x8xf32>,
    %c0_i32_16 = arith.constant 0 : i32
    %35 = arith.cmpi eq, %arg1, %c0_i32_16 : i32
    %36 = arith.extui %35 : i1 to i32
    %c0_i32_17 = arith.constant 0 : i32
    %37 = arith.cmpi ne, %36, %c0_i32_17 : i32
    scf.if %37 {
      %c0_18 = arith.constant 0 : index
      %c0_19 = arith.constant 0 : index
      %38 = vector.load %arg5[%c0_18, %c0_19] : memref<1x8xf32, #tpu.memory_space<vmem>>, vector<1x8xf32>
      %39 = vector.shape_cast %38 : vector<1x8xf32> to vector<1x1x8xf32>
      %cst_20 = arith.constant dense<0.000000e+00> : vector<1xf32>
      %40 = vector.multi_reduction <add>, %39, %cst_20 [1, 2] : vector<1x1x8xf32> to vector<1xf32>
      %41 = vector.shape_cast %40 : vector<1xf32> to vector<1x1x1xf32>
      %42 = vector.extract %41[0, 0, 0] : f32 from vector<1x1x1xf32>
      %cst_21 = arith.constant 0.00416666688 : f32
      %43 = arith.mulf %42, %cst_21 : f32
      %c0_22 = arith.constant 0 : index
      %c0_23 = arith.constant 0 : index
      %44 = vector.load %arg3[%c0_22, %c0_23] : memref<1x128xf32, #tpu.memory_space<vmem>>, vector<1x128xf32>
      %45 = math.absf %44 : vector<1x128xf32>
      %cst_24 = arith.constant 0.000000e+00 : f32
      %46 = vector.broadcast %cst_24 : f32 to vector<1x128xf32>
      %47 = arith.subf %46, %45 : vector<1x128xf32>
      %48 = math.exp %47 : vector<1x128xf32>
      %49 = math.log1p %48 : vector<1x128xf32>
      %50 = vector.shape_cast %49 : vector<1x128xf32> to vector<1x1x128xf32>
      %cst_25 = arith.constant dense<0.000000e+00> : vector<1xf32>
      %51 = vector.multi_reduction <add>, %50, %cst_25 [1, 2] : vector<1x1x128xf32> to vector<1xf32>
      %52 = vector.shape_cast %51 : vector<1xf32> to vector<1x1x1xf32>
      %53 = vector.extract %52[0, 0, 0] : f32 from vector<1x1x1xf32>
      %c0_i32_26 = arith.constant 0 : i32
      %54 = arith.cmpi eq, %arg0, %c0_i32_26 : i32
      %cst_27 = arith.constant 5.000000e-02 : f32
      %55 = arith.mulf %cst_27, %53 : f32
      %cst_28 = arith.constant 0.000000e+00 : f32
      %56 = arith.select %54, %55, %cst_28 : f32
      %57 = arith.addf %43, %56 : f32
      %58 = vector.broadcast %57 : f32 to vector<1x8x128xf32>
      %c0_29 = arith.constant 0 : index
      %c0_30 = arith.constant 0 : index
      %c0_31 = arith.constant 0 : index
      %59 = vector.load %arg4[%c0_29, %c0_30, %c0_31] : memref<1x8x128xf32, #tpu.memory_space<vmem>>, vector<1x8x128xf32>
      tpu.vector_store %arg4[%c0_29, %c0_30, %c0_31], %58 {strides = array<i32>} : memref<1x8x128xf32, #tpu.memory_space<vmem>>, vector<1x8x128xf32>,
    } else {
    }
    return
  }
  func.func @transform_0(%arg0: i32, %arg1: i32) -> (i32, i32) {
    %c1_i32 = arith.constant 1 : i32
    %0 = arith.muli %arg0, %c1_i32 : i32
    %1 = arith.addi %0, %arg1 : i32
    %c0_i32 = arith.constant 0 : i32
    %2 = arith.minsi %1, %c0_i32 : i32
    %c0_i32_0 = arith.constant 0 : i32
    %c0_i32_1 = arith.constant 0 : i32
    return %c0_i32_0, %2 : i32, i32
  }
  func.func @transform_1(%arg0: i32, %arg1: i32) -> (i32, i32) {
    %c0_i32 = arith.constant 0 : i32
    %c0_i32_0 = arith.constant 0 : i32
    %c0_i32_1 = arith.constant 0 : i32
    return %c0_i32, %c0_i32_0 : i32, i32
  }
  func.func @transform_2(%arg0: i32, %arg1: i32) -> (i32, i32, i32) {
    %c0_i32 = arith.constant 0 : i32
    %c0_i32_0 = arith.constant 0 : i32
    %c0_i32_1 = arith.constant 0 : i32
    return %arg0, %c0_i32, %c0_i32_0 : i32, i32, i32
  }
}

</mosaic_0001>

<llo_original>
// kernel: tpu_custom_call.1
$region0: #{tpu_custom_call.1}
  #allocation0 [shape = 'u32[]', space=smem, size = 0x4, offset = 0x4, fixed_abs, tag = 'smem constant byte address 0x4 - core index']
  #allocation1 [shape = 'u32[144,128]{1,0:T(1,128)}', space=vmem, size = 0x12000, scoped, tag = 'internal scratch']
  #allocation2 [shape = 'f32[1,8]{1,0:T(1,128)}', space=vmem, size = 0x200, scoped, tag = 'scratch operand']
  #allocation3 [shape = 'f32[10,8]{1,0:T(8,128)}', space=vmem, size = 0x2000, scoped, tag = 'scratch operand']
  #allocation4 [shape = 's32[1,8]{1,0:T(1,128)}', space=vmem, size = 0x200, scoped, tag = 'scratch operand']
  %s0 = inlined_call_operand.vmem [shape: f32[10,8], index: 0, kind: input, shape index: {}]
  %s1 = inlined_call_operand.vmem [shape: f32[1,128], index: 1, kind: input, shape index: {}]
  %s2 = inlined_call_operand.hbm [shape: f32[1,8,128], index: 2, kind: output, shape index: {}]
  %s3 = sld [smem:[#allocation0]]
  $region26: #{tpu_custom_call.1} parent=0
    _
  %s5 = ssub.s32 1, %s3
  %s6 = scalar_select 0, %s5, %s3
  $region1: #{tpu_custom_call.1} parent=0
    #allocation5 [shape = 'u8[4096]{0}', space=vmem, size = 0x1000, scoped, tag = 'output window, operand 0, single buffered']
    #allocation6 [shape = 's32[1]{0}', space=sflag, size = 0x4, scoped, tag = 'scoped memory for tpu_custom_call.1']
    %7 = vsyncpa [#allocation6], 0
    // Predicated region
    $region2: #{tpu_custom_call.1} parent=1 // pred_check
      _
    $region3: #{tpu_custom_call.1} parent=1 // pred_check_branch
      %9 = sbr.rel (0) target = $region5
    $region4: #{tpu_custom_call.1} parent=1 // pred_region
      %s10 = sadd.s32 0, 0
      %p11 = scmp.lt.s32.totalorder %s10, 0
      %s12 = scalar_select %p11, %s10, 0
      %p13 = scmp.lt.s32.totalorder %s12, 0
      %s14 = scalar_select %p13, %s12, 0
      %s15 = smul.addr %s14, 8
      %s16 = scalar_lea.vmem %s0, %s15
      %s17 = sadd.s32 0, 0
      %p18 = scmp.lt.s32.totalorder %s17, 0
      %s19 = scalar_select %p18, %s17, 0
    $region5: #{tpu_custom_call.1} parent=1 // pred_fallthru
      _
    // Predicated region
    $region6: #{tpu_custom_call.1} parent=1 // pred_check
      _
    $region7: #{tpu_custom_call.1} parent=1 // pred_check_branch
      %21 = sbr.rel (0) target = $region9
    $region8: #{tpu_custom_call.1} parent=1 // pred_region
      _
    $region9: #{tpu_custom_call.1} parent=1 // pred_fallthru
      _
    %s22 = sadd.s32 0, 0
    %p23 = scmp.lt.s32.totalorder %s22, 0
    %s24 = scalar_select %p23, %s22, 0
    %p25 = scmp.lt.s32.totalorder %s24, 0
    %s26 = scalar_select %p25, %s24, 0
    %s27 = smul.addr %s26, 8
    %s28 = scalar_lea.vmem %s0, %s27
    %s29 = sadd.s32 0, 0
    %p30 = scmp.lt.s32.totalorder %s29, 0
    %s31 = scalar_select %p30, %s29, 0
    %p32 = scmp.lt.s32.totalorder %s31, 0
    %s33 = scalar_select %p32, %s31, 0
    %s34 = smul.addr %s33, 8
    %s35 = scalar_lea.vmem %s0, %s34
    %s36 = sadd.s32 0, 0
    %p37 = scmp.lt.s32.totalorder %s36, 0
    %s38 = scalar_select %p37, %s36, 0
    %p39 = scmp.eq.s32.totalorder 0, 0
    // Predicated region
    $region10: #{tpu_custom_call.1} parent=1 // pred_check
      %p40 = pneg %p39
    $region11: #{tpu_custom_call.1} parent=1 // pred_check_branch
      %42 = sbr.rel (%p40) target = $region13
    $region12: #{tpu_custom_call.1} parent=1 // pred_region
      %vm43 = vcmask 57344
      %44 = vst.msk [vmem:[#allocation2] sm:$0x1] %vm43, 0.0
      %v45 = vlaneseq
      %v46 = vshrl.u32 %v45, 7
      %v47 = vadd.s32 %v46, 8
      %v48 = vcvt.s32.f32 %v46
      %v49 = vcvt.s32.f32 %v47
      %vm50 = vcmask 64512
      %51 = vst.msk [vmem:[#allocation3] sm:$0xff] %vm50, %v48
      %vm52 = vcmask 58368
      %53 = vst.msk [vmem:[#allocation3 + $0x8] sm:$0x3] %vm52, %v49
      %v54 = vlaneseq
      %v55 = vand.u32 %v54, 127
      %56 = vst.msk [vmem:[#allocation4] sm:$0x1] %vm43, %v55
    $region13: #{tpu_custom_call.1} parent=1 // pred_fallthru
      _
    %v57 = vld [vmem:[%s35] sm:$0xff]
    %v58 = vld [vmem:[%s35 + $0x8] sm:$0x3]
    %v59 = vld [vmem:[#allocation3] sm:$0xff]
    %v60 = vld [vmem:[#allocation3 + $0x8] sm:$0x3]
    %vm61 = vcmask 64512
    %v62 = vsel %vm61, %v57, -inf
    %vm63 = vcmask 58368
    %v64 = vsel %vm63, %v58, -inf
    %v65 = vmax.f32 %v62, %v64
    %v66 = vrot.slane %v65, 4
    %v67 = vmax.f32 %v65, %v66
    %v68 = vrot.slane %v67, 2
    %v69 = vmax.f32 %v67, %v68
    %v70 = vrot.slane %v69, 1
    %v71 = vmax.f32 %v69, %v70
    %vm72 = vcmp.eq.f32.partialorder %v57, %v71
    %vm73 = vcmp.eq.f32.partialorder %v58, %v71
    %v74 = vsel %vm72, %v59, 10.0
    %v75 = vsel %vm73, %v60, 10.0
    %v76 = vsel %vm61, %v74, inf
    %v77 = vsel %vm63, %v75, inf
    %v78 = vmin.f32 %v76, %v77
    %v79 = vrot.slane %v78, 4
    %v80 = vmin.f32 %v78, %v79
    %v81 = vrot.slane %v80, 2
    %v82 = vmin.f32 %v80, %v81
    %v83 = vrot.slane %v82, 1
    %v84 = vmin.f32 %v82, %v83
    %vm85 = vcmp.eq.f32.partialorder %v84, 3.0
    %vm86 = vcmp.eq.f32.partialorder %v59, 3.0
    %vm87 = vcmp.eq.f32.partialorder %v60, 3.0
    %v88 = vsel %vm85, 1, 0
    %vm89 = vcmp.eq.s32.totalorder %v88, 1
    %vm90 = vmxor %vm89, %vm86
    %vm91 = vmxor %vm89, %vm87
    %v92 = vsub.f32 0.0, %v57
    %v93 = vsub.f32 0.0, %v58
    %v94 = vsel %vm90, %v92, %v57
    %v95 = vsel %vm91, %v93, %v58
    %v96 = vmax.f32 %v94, 0.0
    %v97 = vmax.f32 %v95, 0.0
    %v98 = vand.u32 2147483647, %v94
    %v99 = vand.u32 2147483647, %v95
    %v100 = vsub.f32 0.0, %v98
    %v101 = vsub.f32 0.0, %v99
    %v102 = vmul.f32 %v100, 1.442695
    %v103 = vpow.pop %v102
    %v104 = vmul.f32 %v101, 1.442695
    %v105 = vpow.pop %v104
    %v106 = vadd.f32 %v103, 1.0
    %v107 = vlog2.pop %v106
    %v108 = vmul.f32 %v107, 0.6931472
    %v109 = vmul.f32 -0.5, %v103
    %v110 = vadd.f32 %v109, 1.0
    %v111 = vmul.f32 %v110, %v103
    %v112 = vand.u32 2147483647, %v103
    %vm113 = vcmp.lt.f32.partialorder %v112, 0.0004427343
    %v114 = vsel %vm113, %v111, %v108
    %v115 = vadd.f32 %v105, 1.0
    %v116 = vlog2.pop %v115
    %v117 = vmul.f32 %v116, 0.6931472
    %v118 = vmul.f32 -0.5, %v105
    %v119 = vadd.f32 %v118, 1.0
    %v120 = vmul.f32 %v119, %v105
    %v121 = vand.u32 2147483647, %v105
    %vm122 = vcmp.lt.f32.partialorder %v121, 0.0004427343
    %v123 = vsel %vm122, %v120, %v117
    %v124 = vadd.f32 %v96, %v114
    %v125 = vadd.f32 %v97, %v123
    %v126 = vsel %vm61, %v124, 0.0
    %v127 = vsel %vm63, %v125, 0.0
    %v128 = vadd.f32 %v126, %v127
    %v129 = vrot.slane %v128, 4
    %v130 = vadd.f32 %v128, %v129
    %v131 = vrot.slane %v130, 2
    %v132 = vadd.f32 %v130, %v131
    %v133 = vrot.slane %v132, 1
    %v134 = vadd.f32 %v132, %v133
    %v135 = vld [vmem:[#allocation2] sm:$0x1]
    %v136 = vadd.f32 %v135, %v134
    %vm137 = vcmask 57344
    %138 = vst.msk [vmem:[#allocation2] sm:$0x1] %vm137, %v136
    // Predicated region
    $region14: #{tpu_custom_call.1} parent=1 // pred_check
      %p139 = pneg %p39
    $region15: #{tpu_custom_call.1} parent=1 // pred_check_branch
      %141 = sbr.rel (%p139) target = $region17
    $region16: #{tpu_custom_call.1} parent=1 // pred_region
      %v142 = vld [vmem:[#allocation2] sm:$0x1]
      %v143 = vsel %vm137, %v142, 0.0
      %144 = vadd.xlane.f32.xlu0 %v143
      %v145 = vpop.xlane.xlu0 %144
      %v146 = vrot.slane %v145, 4
      %v147 = vadd.f32 %v145, %v146
      %v148 = vrot.slane %v147, 2
      %v149 = vadd.f32 %v147, %v148
      %v150 = vrot.slane %v149, 1
      %v151 = vadd.f32 %v149, %v150
      %s152 = vtos %v151
      %s153 = smul.f32 %s152, 0.004166667
      %v154 = vld [vmem:[%s1] sm:$0x1]
      %v155 = vand.u32 2147483647, %v154
      %v156 = vsub.f32 0.0, %v155
      %v157 = vmul.f32 %v156, 1.442695
      %v158 = vpow.pop %v157
      %v159 = vadd.f32 %v158, 1.0
      %v160 = vlog2.pop %v159
      %v161 = vmul.f32 %v160, 0.6931472
      %v162 = vmul.f32 -0.5, %v158
      %v163 = vadd.f32 %v162, 1.0
      %v164 = vmul.f32 %v163, %v158
      %v165 = vand.u32 2147483647, %v158
      %vm166 = vcmp.lt.f32.partialorder %v165, 0.0004427343
      %v167 = vsel %vm166, %v164, %v161
      %vm168 = vcmask 1040384
      %v169 = vsel %vm168, %v167, 0.0
      %170 = vadd.xlane.f32.xlu0 %v169
      %v171 = vpop.xlane.xlu0 %170
      %v172 = vrot.slane %v171, 4
      %v173 = vadd.f32 %v171, %v172
      %v174 = vrot.slane %v173, 2
      %v175 = vadd.f32 %v173, %v174
      %v176 = vrot.slane %v175, 1
      %v177 = vadd.f32 %v175, %v176
      %s178 = vtos %v177
      %p179 = scmp.eq.s32.totalorder 0, 0
      %s180 = smul.f32 %s178, 0.05
      %s181 = scalar_select %p179, %s180, 0.0
      %s182 = sadd.f32 %s153, %s181
      %v183 = vstv %s182
      %184 = vst [vmem:[#allocation5] sm:$0xff] %v183
    $region17: #{tpu_custom_call.1} parent=1 // pred_fallthru
      _
    // Predicated region
    $region18: #{tpu_custom_call.1} parent=1 // pred_check
      _
    $region19: #{tpu_custom_call.1} parent=1 // pred_check_branch
      %186 = sbr.rel (0) target = $region21
    $region20: #{tpu_custom_call.1} parent=1 // pred_region
      %s188 = ssub.s32 128, 128
      %189 = vsyncadd [#allocation6], %s188
      %s191 = sshll.u32 [#allocation5], 4
      %s192 = int_to_ptr.vmem [resolvable:$true] %s191
      %194 = dma.vmem_to_hbm [thread:$0]  %s192, 128, %s2, [#allocation6]
    $region21: #{tpu_custom_call.1} parent=1 // pred_fallthru
      _
    // Predicated region
    $region22: #{tpu_custom_call.1} parent=1 // pred_check
      _
    $region23: #{tpu_custom_call.1} parent=1 // pred_check_branch
      %196 = sbr.rel (0) target = $region25
    $region24: #{tpu_custom_call.1} parent=1 // pred_region
      %197 = dma.done [#allocation6], 128
    $region25: #{tpu_custom_call.1} parent=1 // pred_fallthru
      _
    %198 = vsyncpa [#allocation6], 1

</llo_original>
